<compile_context>
chip_gen: v5e
topology: v5e:2x2
jax: 0.10.0
libtpu: 0.0.40
codegen_flags: <defaults>
</compile_context>

<pallas_src>
import jax
import jax.numpy as jnp
from jax.experimental import pallas as pl
from jax.experimental.pallas import tpu as pltpu


def _copy_kernel(x_ref, o_ref):
    # Identical block shapes/offsets for input and output: straight copy.
    o_ref[...] = x_ref[...]


def _sublane_multiple(dtype) -> int:
    # f32 -> 8, bf16/f16 -> 16, int8/fp8 -> 32 (sub-32-bit packs along sublanes).
    itemsize = jnp.dtype(dtype).itemsize
    return max(8, 32 // itemsize)


def chomp1d(x: jax.Array, chomp_size: int) -> jax.Array:
    """Pallas equivalent of PyTorch Chomp1d: x[:, :, :-chomp_size].contiguous()."""
    assert chomp_size > 0, "chomp_size must be positive"
    n, c, l = x.shape
    l_out = l - chomp_size
    assert l_out > 0, "chomp_size must be smaller than the length dimension"

    rows = n * c
    x2 = x.reshape(rows, l)  # contiguous reshape: free
    itemsize = jnp.dtype(x.dtype).itemsize
    sub = _sublane_multiple(x.dtype)

    # ---- VMEM budget -------------------------------------------------------
    # 4 buffers live at once (in + out, each double-buffered).  12 MiB total
    # footprint fits every generation's scoped default (v5e: 16 MiB).
    vmem_budget = 12 * 1024 * 1024
    per_block_budget = vmem_budget // 4  # bytes per (tr, tl) block

    # ---- Lane tile first (lane-dense output is the biggest lever) ----------
    lanes_full = 128 * pl.cdiv(l_out, 128)  # L_out rounded up to a vreg width
    tl_cap = 8192
    if lanes_full <= tl_cap:
        # Single lane block: lane grid axis collapses, output DMA is contiguous.
        tl = lanes_full
    else:
        # Balance lane blocks so there is no near-empty trailing column block.
        n_lane_blocks = pl.cdiv(lanes_full, tl_cap)
        tl = 128 * pl.cdiv(pl.cdiv(l_out, n_lane_blocks), 128)

    # ---- Row tile from the VMEM budget (no artificial small cap) -----------
    rows_padded = sub * pl.cdiv(rows, sub)
    max_tr_budget = max(sub, (per_block_budget // (tl * itemsize)) // sub * sub)
    tr = min(max_tr_budget, 4096, rows_padded)
    # Megacore (v7x): guarantee >= 2 row blocks so both TensorCores get work.
    if rows_padded >= 2 * sub:
        half = max(sub, (rows_padded // 2) // sub * sub)
        tr = min(tr, half)
    tr = max(tr, sub)

    grid = (pl.cdiv(rows, tr), pl.cdiv(l_out, tl))

    out2 = pl.pallas_call(
        _copy_kernel,
        out_shape=jax.ShapeDtypeStruct((rows, l_out), x.dtype),
        grid_spec=pltpu.PrefetchScalarGridSpec(
            num_scalar_prefetch=0,
            grid=grid,
            # Same block shape + index_map for input and output: the kernel
            # body is a pure whole-block copy.
            in_specs=[pl.BlockSpec((tr, tl), lambda r, li: (r, li))],
            out_specs=pl.BlockSpec((tr, tl), lambda r, li: (r, li)),
        ),
        compiler_params=pltpu.CompilerParams(
            dimension_semantics=("parallel", "parallel"),
            vmem_limit_bytes=24 * 1024 * 1024,
        ),
        cost_estimate=pl.CostEstimate(
            flops=0,
            transcendentals=0,
            bytes_accessed=2 * rows * l_out * itemsize,
        ),
    )(x2)

    return out2.reshape(n, c, l_out)


if __name__ == "__main__":
    key = jax.random.PRNGKey(0)

    # Small shapes consistent with a TCN residual block input: (N, C, L).
    N, C, L = 2, 4, 16
    chomp_size = 3  # e.g. (kernel_size - 1) * dilation in the TCN

    x = jax.random.normal(key, (N, C, L), dtype=jnp.float32)
    out = jax.block_until_ready(chomp1d(x, chomp_size))

    ref = x[:, :, :-chomp_size]
    assert out.shape == (N, C, L - chomp_size), out.shape
    assert out.dtype == x.dtype
    assert jnp.array_equal(out, ref), "Pallas output mismatch vs reference slice"

    # Second small check: non-128-multiple length, >1 row block.
    key2 = jax.random.PRNGKey(1)
    x2 = jax.random.normal(key2, (2, 16, 300), dtype=jnp.float32)
    out2 = jax.block_until_ready(chomp1d(x2, 44))
    assert jnp.array_equal(out2, x2[:, :, :-44]), "mismatch on tail-block case"

    # Third check: bf16 dtype (16-sublane alignment path).
    x3 = jax.random.normal(jax.random.PRNGKey(2), (3, 5, 70), dtype=jnp.bfloat16)
    out3 = jax.block_until_ready(chomp1d(x3, 7))
    assert jnp.array_equal(out3, x3[:, :, :-7]), "mismatch on bf16 case"

    print("KERNEL_OK")
</pallas_src>

<mosaic_0001>
module attributes {stable_mosaic.version = 11 : i64} {
  func.func @_copy_kernel(%arg0: i32, %arg1: i32, %arg2: memref<8x128xf32, #tpu.memory_space<vmem>>, %arg3: memref<8x128xf32, #tpu.memory_space<vmem>>) attributes {dimension_semantics = [#tpu.dimension_semantics<parallel>, #tpu.dimension_semantics<parallel>], iteration_bounds = array<i64: 1, 1>, scalar_prefetch = 0 : i64, scratch_operands = 0 : i64, tpu.core_type = #tpu.core_type<tc>, window_params = [{transform_indices = @transform_0, window_bounds = array<i64: 8, 128>}, {transform_indices = @transform_1, window_bounds = array<i64: 8, 128>}]} {
    %c0 = arith.constant 0 : index
    %c0_0 = arith.constant 0 : index
    %0 = vector.load %arg2[%c0, %c0_0] : memref<8x128xf32, #tpu.memory_space<vmem>>, vector<8x128xf32>
    %c0_1 = arith.constant 0 : index
    %c0_2 = arith.constant 0 : index
    %1 = vector.load %arg3[%c0_1, %c0_2] : memref<8x128xf32, #tpu.memory_space<vmem>>, vector<8x128xf32>
    tpu.vector_store %arg3[%c0_1, %c0_2], %0 {strides = array<i32>} : memref<8x128xf32, #tpu.memory_space<vmem>>, vector<8x128xf32>,
    return
  }
  func.func @transform_0(%arg0: i32, %arg1: i32) -> (i32, i32) {
    %c0_i32 = arith.constant 0 : i32
    return %arg0, %arg1 : i32, i32
  }
  func.func @transform_1(%arg0: i32, %arg1: i32) -> (i32, i32) {
    %c0_i32 = arith.constant 0 : i32
    return %arg0, %arg1 : i32, i32
  }
}

</mosaic_0001>

<llo_original>
// kernel: tpu_custom_call.1
$region0: #{tpu_custom_call.1}
  #allocation0 [shape = 'u32[]', space=smem, size = 0x4, offset = 0x4, fixed_abs, tag = 'smem constant byte address 0x4 - core index']
  #allocation1 [shape = 'u32[72,128]{1,0:T(1,128)}', space=vmem, size = 0x9000, scoped, tag = 'internal scratch']
  %s0 = inlined_call_operand.hbm [shape: f32[8,16], index: 0, kind: input, shape index: {}]
  %s1 = inlined_call_operand.hbm [shape: f32[8,13], index: 1, kind: output, shape index: {}]
  %s2 = sld [smem:[#allocation0]]
  $region18: #{tpu_custom_call.1} parent=0
    _
  %s4 = ssub.s32 1, %s2
  %s5 = scalar_select 0, %s4, %s2
  $region1: #{tpu_custom_call.1} parent=0
    #allocation2 [shape = 'u8[4096]{0}', space=vmem, size = 0x1000, scoped, tag = 'input window, operand 0, single buffered']
    #allocation3 [shape = 's32[1]{0}', space=sflag, size = 0x4, scoped, tag = 'scoped memory for tpu_custom_call.1']
    #allocation4 [shape = 's32[1]{0}', space=sflag, size = 0x4, scoped, tag = 'scoped memory for tpu_custom_call.1']
    #allocation5 [shape = 'u8[4096]{0}', space=vmem, size = 0x1000, scoped, tag = 'output window, operand 0, single buffered']
    %6 = vsyncpa [#allocation3], 0
    %7 = vsyncpa [#allocation4], 0
    // Predicated region
    $region2: #{tpu_custom_call.1} parent=1 // pred_check
      _
    $region3: #{tpu_custom_call.1} parent=1 // pred_check_branch
      %9 = sbr.rel (0) target = $region5
    $region4: #{tpu_custom_call.1} parent=1 // pred_region
      %11 = vsyncadd [#allocation3], 0
      %s13 = sshll.u32 %s0, 4
      %s14 = int_to_ptr.hbm [resolvable:$true] %s13
      %s15 = sshll.u32 [#allocation2], 4
      %s16 = int_to_ptr.vmem [resolvable:$true] %s15
      %18 = dma.hbm_to_vmem [thread:$0]  %s14, 128, %s16, [#allocation3]
    $region5: #{tpu_custom_call.1} parent=1 // pred_fallthru
      _
    // Predicated region
    $region6: #{tpu_custom_call.1} parent=1 // pred_check
      _
    $region7: #{tpu_custom_call.1} parent=1 // pred_check_branch
      %20 = sbr.rel (0) target = $region9
    $region8: #{tpu_custom_call.1} parent=1 // pred_region
      %22 = dma.done [#allocation3], 128
    $region9: #{tpu_custom_call.1} parent=1 // pred_fallthru
      _
    %v23 = vld [vmem:[#allocation2] sm:$0xff]
    %24 = vst [vmem:[#allocation5] sm:$0xff] %v23
    // Predicated region
    $region10: #{tpu_custom_call.1} parent=1 // pred_check
      _
    $region11: #{tpu_custom_call.1} parent=1 // pred_check_branch
      %26 = sbr.rel (0) target = $region13
    $region12: #{tpu_custom_call.1} parent=1 // pred_region
      %28 = vsyncadd [#allocation4], 0
      %s30 = sshll.u32 [#allocation5], 4
      %s31 = int_to_ptr.vmem [resolvable:$true] %s30
      %s32 = sshll.u32 %s1, 4
      %s33 = int_to_ptr.hbm [resolvable:$true] %s32
      %35 = dma.vmem_to_hbm [thread:$0]  %s31, 128, %s33, [#allocation4]
    $region13: #{tpu_custom_call.1} parent=1 // pred_fallthru
      _
    // Predicated region
    $region14: #{tpu_custom_call.1} parent=1 // pred_check
      _
    $region15: #{tpu_custom_call.1} parent=1 // pred_check_branch
      %37 = sbr.rel (0) target = $region17
    $region16: #{tpu_custom_call.1} parent=1 // pred_region
      %39 = dma.done [#allocation4], 128
    $region17: #{tpu_custom_call.1} parent=1 // pred_fallthru
      _
    %40 = vsyncpa [#allocation3], 1
    %41 = vsyncpa [#allocation4], 1

</llo_original>
